<compile_context>
chip_gen: v7x
topology: tpu7x:2x2x1
jax: 0.10.0
libtpu: 0.0.40
codegen_flags: <defaults>
</compile_context>

<pallas_src>
import functools

import jax
import jax.numpy as jnp
from jax import lax
from jax.experimental import pallas as pl
from jax.experimental.pallas import tpu as pltpu

LANES = 128
SUBLANES = 8


def _chip_config():
    """Per-generation (row_cap, core_splits, vmem_limit_bytes), safe fallback."""
    try:
        kind = jax.devices()[0].device_kind.lower()
    except Exception:
        kind = ""
    if "v7" in kind or "7x" in kind:
        # v7x: 2 TCs/chip, 64 MiB VMEM per TC (32 MiB scoped default).
        # 8192-row f32 blocks -> 2 inputs x 2 buffers x 4 MiB = 16 MiB.
        return 8192, 2, 48 << 20
    if "v6" in kind:
        # v6e: 1 TC, 128 MiB VMEM (32 MiB scoped default); 16 MiB usage fits.
        return 8192, 1, 64 << 20
    if "v5e" in kind or "v5 lite" in kind or "v5lite" in kind:
        # v5e: 1 TC, 16 MiB scoped default -> 4096 rows = 8 MiB usage; raise the
        # limit so tile_rows sweeps up to 8192 are possible (physical 128 MiB).
        return 4096, 1, 64 << 20
    # Unknown chip: conservative sizing, default scoped-VMEM limit.
    return 4096, 1, None


def _l1_sum_kernel(pred_ref, targ_ref, out_ref, *, tile_rows, valid_rows,
                   first_masked_tile, need_mask, split_grid):
    if split_grid:
        i = pl.program_id(1)                                  # inner (sequential) step
        t = pl.program_id(0) * pl.num_programs(1) + i         # logical tile index
    else:
        i = pl.program_id(0)
        t = i

    @pl.when(i == 0)
    def _():
        out_ref[...] = jnp.zeros_like(out_ref)

    diff = jnp.abs(pred_ref[...].astype(jnp.float32)
                   - targ_ref[...].astype(jnp.float32))

    def fold(x):
        # Fold the tile onto the vreg-shaped (8,128) accumulator: pure VPU adds,
        # no per-step cross-lane reduce and no per-step scalar dependency.
        return x.reshape(tile_rows // SUBLANES, SUBLANES, LANES).sum(axis=0)

    if not need_mask:
        out_ref[...] += fold(diff)
    else:
        # Only the partial edge tile / grid-overhang tiles pay the masking cost.
        is_edge = t >= first_masked_tile

        @pl.when(jnp.logical_not(is_edge))
        def _():
            out_ref[...] += fold(diff)

        @pl.when(is_edge)
        def _():
            # Rows >= valid_rows belong to the unspecified region of a partial
            # edge block or to an overhang tile (clamped index_map) -> zero.
            row = t * tile_rows + lax.broadcasted_iota(jnp.int32, diff.shape, 0)
            out_ref[...] += fold(jnp.where(row < valid_rows, diff,
                                           jnp.float32(0.0)))


@functools.partial(jax.jit, static_argnames=("tile_rows",))
def vgg_perceptual_loss(pred, target, *, tile_rows=8192):
    """Pallas equivalent of VGGPerceptualLoss()(pred, target) == mean(|pred - target|)."""
    assert pred.shape == target.shape, "l1_loss with default args needs equal shapes"
    n_elems = int(pred.size)

    # dtype-aware sublane multiple: f32 -> 8 rows, bf16 -> 16, int8/fp8 -> 32.
    min_itemsize = min(pred.dtype.itemsize, target.dtype.itemsize, 4)
    sub_mult = SUBLANES * max(1, 4 // max(1, min_itemsize))

    pred_flat = jnp.ravel(pred)
    targ_flat = jnp.ravel(target)

    # Tiny inputs: not worth a kernel launch (also guarantees rows >= sub_mult).
    if n_elems < sub_mult * LANES:
        return jnp.mean(jnp.abs(pred_flat.astype(jnp.float32)
                                - targ_flat.astype(jnp.float32)))

    row_cap, core_splits, vmem_limit = _chip_config()

    # Kernel consumes the 128-divisible prefix (zero-copy bitcast reshape for
    # contiguous inputs). Any <128-element tail is added below with plain jnp.
    rows = n_elems // LANES
    main = rows * LANES

    rows_floor = (rows // sub_mult) * sub_mult
    tr = min(int(tile_rows), rows_floor, row_cap)
    tr = max(sub_mult, (tr // sub_mult) * sub_mult)

    num_tiles = pl.cdiv(rows, tr)
    core_splits = max(1, min(core_splits, num_tiles))
    split_grid = core_splits > 1
    inner = pl.cdiv(num_tiles, core_splits)
    covered_rows = core_splits * inner * tr
    need_mask = covered_rows != rows
    first_masked_tile = rows // tr          # tiles >= this need the row mask
    last_tile = num_tiles - 1

    pred2d = pred_flat[:main].reshape(rows, LANES)
    targ2d = targ_flat[:main].reshape(rows, LANES)

    if split_grid:
        grid = (core_splits, inner)
        # Clamp so an overhang step re-reads a valid block; its contribution is
        # fully masked out in the kernel (edge branch).
        in_map = lambda c, i: (jnp.minimum(c * inner + i, last_tile), 0)
        out_map = lambda c, i: (c, 0)
        dim_sem = (pltpu.CORE_PARALLEL, pltpu.ARBITRARY)
    else:
        grid = (num_tiles,)
        in_map = lambda i: (i, 0)
        out_map = lambda i: (0, 0)
        dim_sem = (pltpu.ARBITRARY,)

    kernel = functools.partial(
        _l1_sum_kernel, tile_rows=tr, valid_rows=rows,
        first_masked_tile=first_masked_tile, need_mask=need_mask,
        split_grid=split_grid)

    bytes_accessed = main * (pred.dtype.itemsize + target.dtype.itemsize) \
        + core_splits * SUBLANES * LANES * 4

    # TODO(synk): sweep pipeline_mode=pl.Buffered(3) on the input BlockSpecs on
    # real workloads; kept at the default double-buffering here for robustness.
    partials = pl.pallas_call(
        kernel,
        out_shape=jax.ShapeDtypeStruct(
            (core_splits * SUBLANES, LANES), jnp.float32),
        grid_spec=pltpu.PrefetchScalarGridSpec(
            num_scalar_prefetch=0,
            grid=grid,
            in_specs=[
                pl.BlockSpec((tr, LANES), in_map),
                pl.BlockSpec((tr, LANES), in_map),
            ],
            out_specs=pl.BlockSpec((SUBLANES, LANES), out_map),
        ),
        compiler_params=pltpu.CompilerParams(
            dimension_semantics=dim_sem,
            vmem_limit_bytes=vmem_limit,
        ),
        cost_estimate=pl.CostEstimate(
            flops=3 * main, transcendentals=0,
            bytes_accessed=int(bytes_accessed)),
    )(pred2d, targ2d)

    total = jnp.sum(partials, dtype=jnp.float32)
    if main != n_elems:  # ragged tail (< 128 elements): tiny, fused by XLA.
        total = total + jnp.sum(
            jnp.abs(pred_flat[main:].astype(jnp.float32)
                    - targ_flat[main:].astype(jnp.float32)))
    return total / jnp.float32(n_elems)


if __name__ == "__main__":
    # NOTE: VGGPerceptualLoss.__init__ defines no parameters (the "VGG" part is
    # a stub in the reference module), so there are no weights to initialize.
    key = jax.random.PRNGKey(0)
    k1, k2 = jax.random.split(key)
    # NCHW, matching the PyTorch conv-input convention.
    pred = jax.random.normal(k1, (2, 4, 16, 16), dtype=jnp.float32)
    target = jax.random.normal(k2, (2, 4, 16, 16), dtype=jnp.float32)

    loss = vgg_perceptual_loss(pred, target)
    loss = jax.block_until_ready(loss)

    # Cross-check against the pure-JAX reference of F.l1_loss.
    ref = jnp.mean(jnp.abs(pred - target))
    assert jnp.allclose(loss, ref, rtol=1e-5, atol=1e-6), (loss, ref)

    print("KERNEL_OK")
</pallas_src>

<mosaic_0001>
module attributes {stable_mosaic.version = 11 : i64} {
  func.func @_l1_sum_kernel(%arg0: i32, %arg1: memref<16x128xf32, #tpu.memory_space<vmem>>, %arg2: memref<16x128xf32, #tpu.memory_space<vmem>>, %arg3: memref<8x128xf32, #tpu.memory_space<vmem>>) attributes {dimension_semantics = [#tpu.dimension_semantics<arbitrary>], iteration_bounds = array<i64: 1>, scalar_prefetch = 0 : i64, scratch_operands = 0 : i64, tpu.core_type = #tpu.core_type<tc>, window_params = [{transform_indices = @transform_0, window_bounds = array<i64: 16, 128>}, {transform_indices = @transform_1, window_bounds = array<i64: 16, 128>}, {pipeline_mode = #tpu.pipeline_mode<synchronous>, transform_indices = @transform_2, window_bounds = array<i64: 8, 128>}]} {
    %c0_i32 = arith.constant 0 : i32
    %0 = arith.cmpi eq, %arg0, %c0_i32 : i32
    %1 = arith.extui %0 : i1 to i32
    %c0_i32_0 = arith.constant 0 : i32
    %2 = arith.cmpi ne, %1, %c0_i32_0 : i32
    scf.if %2 {
      %cst_8 = arith.constant 0.000000e+00 : f32
      %12 = vector.broadcast %cst_8 : f32 to vector<8x128xf32>
      %c0_9 = arith.constant 0 : index
      %c0_10 = arith.constant 0 : index
      %13 = vector.load %arg3[%c0_9, %c0_10] : memref<8x128xf32, #tpu.memory_space<vmem>>, vector<8x128xf32>
      tpu.vector_store %arg3[%c0_9, %c0_10], %12 {strides = array<i32>} : memref<8x128xf32, #tpu.memory_space<vmem>>, vector<8x128xf32>,
    } else {
    }
    %c0 = arith.constant 0 : index
    %c0_1 = arith.constant 0 : index
    %3 = vector.load %arg1[%c0, %c0_1] : memref<16x128xf32, #tpu.memory_space<vmem>>, vector<16x128xf32>
    %c0_2 = arith.constant 0 : index
    %c0_3 = arith.constant 0 : index
    %4 = vector.load %arg2[%c0_2, %c0_3] : memref<16x128xf32, #tpu.memory_space<vmem>>, vector<16x128xf32>
    %5 = arith.subf %3, %4 : vector<16x128xf32>
    %6 = math.absf %5 : vector<16x128xf32>
    %c0_4 = arith.constant 0 : index
    %c0_5 = arith.constant 0 : index
    %7 = vector.load %arg3[%c0_4, %c0_5] : memref<8x128xf32, #tpu.memory_space<vmem>>, vector<8x128xf32>
    %8 = vector.shape_cast %6 : vector<16x128xf32> to vector<2x8x128xf32>
    %cst = arith.constant dense<0.000000e+00> : vector<8x128xf32>
    %9 = vector.multi_reduction <add>, %8, %cst [0] : vector<2x8x128xf32> to vector<8x128xf32>
    %10 = arith.addf %7, %9 : vector<8x128xf32>
    %c0_6 = arith.constant 0 : index
    %c0_7 = arith.constant 0 : index
    %11 = vector.load %arg3[%c0_6, %c0_7] : memref<8x128xf32, #tpu.memory_space<vmem>>, vector<8x128xf32>
    tpu.vector_store %arg3[%c0_6, %c0_7], %10 {strides = array<i32>} : memref<8x128xf32, #tpu.memory_space<vmem>>, vector<8x128xf32>,
    return
  }
  func.func @transform_0(%arg0: i32) -> (i32, i32) {
    %c0_i32 = arith.constant 0 : i32
    %c0_i32_0 = arith.constant 0 : i32
    return %arg0, %c0_i32 : i32, i32
  }
  func.func @transform_1(%arg0: i32) -> (i32, i32) {
    %c0_i32 = arith.constant 0 : i32
    %c0_i32_0 = arith.constant 0 : i32
    return %arg0, %c0_i32 : i32, i32
  }
  func.func @transform_2(%arg0: i32) -> (i32, i32) {
    %c0_i32 = arith.constant 0 : i32
    %c0_i32_0 = arith.constant 0 : i32
    %c0_i32_1 = arith.constant 0 : i32
    return %c0_i32, %c0_i32_0 : i32, i32
  }
}

</mosaic_0001>

<llo_original>
// kernel: vgg_perceptual_loss.1
$region0: #{vgg_perceptual_loss.1}
  #allocation0 [shape = 'u32[]', space=smem, size = 0x4, offset = 0x4, fixed_abs, tag = 'smem constant byte address 0x4 - core index']
  #allocation1 [shape = 'u32[144,128]{1,0:T(1,128)}', space=vmem, size = 0x12000, scoped, tag = 'internal scratch']
  %s0 = inlined_call_operand.vmem [shape: f32[16,128], index: 0, kind: input, shape index: {}]
  %s1 = inlined_call_operand.vmem [shape: f32[16,128], index: 1, kind: input, shape index: {}]
  %s2 = inlined_call_operand.vmem [shape: f32[8,128], index: 2, kind: output, shape index: {}]
  %s3 = sld [smem:[#allocation0]]
  $region22: #{vgg_perceptual_loss.1} parent=0
    _
  %s5 = ssub.s32 1, %s3
  %s6 = scalar_select 0, %s5, %s3
  // Predicated region
  $region2: #{vgg_perceptual_loss.1} parent=0 // pred_check
    _
  $region3: #{vgg_perceptual_loss.1} parent=0 // pred_check_branch
    %8 = sbr.rel (0) target = $region5
  $region4: #{vgg_perceptual_loss.1} parent=0 // pred_region
    _
  $region5: #{vgg_perceptual_loss.1} parent=0 // pred_fallthru
    _
  // Predicated region
  $region6: #{vgg_perceptual_loss.1} parent=0 // pred_check
    _
  $region7: #{vgg_perceptual_loss.1} parent=0 // pred_check_branch
    %10 = sbr.rel (0) target = $region9
  $region8: #{vgg_perceptual_loss.1} parent=0 // pred_region
    _
  $region9: #{vgg_perceptual_loss.1} parent=0 // pred_fallthru
    _
  %p11 = scmp.eq.s32.totalorder 0, 0
  // Predicated region
  $region10: #{vgg_perceptual_loss.1} parent=0 // pred_check
    %p12 = pneg %p11
  $region11: #{vgg_perceptual_loss.1} parent=0 // pred_check_branch
    %14 = sbr.rel (%p12) target = $region13
  $region12: #{vgg_perceptual_loss.1} parent=0 // pred_region
    %15 = vst [vmem:[%s2] sm:$0xff] 0.0
  $region13: #{vgg_perceptual_loss.1} parent=0 // pred_fallthru
    _
  %v16 = vld [vmem:[%s0] sm:$0xff]
  %v17 = vld [vmem:[%s0 + $0x8] sm:$0xff]
  %v18 = vld [vmem:[%s1] sm:$0xff]
  %v19 = vld [vmem:[%s1 + $0x8] sm:$0xff]
  %v20 = vsub.f32 %v16, %v18
  %v21 = vsub.f32 %v17, %v19
  %v22 = vand.u32 2147483647, %v20
  %v23 = vand.u32 2147483647, %v21
  %v24 = vld [vmem:[%s2] sm:$0xff]
  %v25 = vadd.f32 %v22, %v23
  %v26 = vadd.f32 %v24, %v25
  %27 = vst [vmem:[%s2] sm:$0xff] %v26
  // Predicated region
  $region14: #{vgg_perceptual_loss.1} parent=0 // pred_check
    _
  $region15: #{vgg_perceptual_loss.1} parent=0 // pred_check_branch
    %29 = sbr.rel (0) target = $region17
  $region16: #{vgg_perceptual_loss.1} parent=0 // pred_region
    _
  $region17: #{vgg_perceptual_loss.1} parent=0 // pred_fallthru
    _
  // Predicated region
  $region18: #{vgg_perceptual_loss.1} parent=0 // pred_check
    _
  $region19: #{vgg_perceptual_loss.1} parent=0 // pred_check_branch
    %31 = sbr.rel (0) target = $region21
  $region20: #{vgg_perceptual_loss.1} parent=0 // pred_region
    _
  $region21: #{vgg_perceptual_loss.1} parent=0 // pred_fallthru
    _

</llo_original>
